<compile_context>
chip_gen: v5e
topology: v5e:2x2
jax: 0.10.0
libtpu: 0.0.40
codegen_flags: <defaults>
</compile_context>

<pallas_src>
import functools

import numpy as np
import jax
import jax.numpy as jnp
from jax import lax
from jax.experimental import pallas as pl
from jax.experimental.pallas import tpu as pltpu


# ----------------------------------------------------------------------------------------
# pltpu.roll direction probe: we want np.roll semantics (out[i] = in[(i - shift) % n]).
# ----------------------------------------------------------------------------------------
_ROLL_SIGN = None


def _roll_probe_kernel(x_ref, o_ref):
    o_ref[...] = pltpu.roll(x_ref[...], 1, axis=1)


def _pltpu_roll_sign():
    """+1 if pltpu.roll already matches np.roll, -1 if the rotate direction is flipped."""
    global _ROLL_SIGN
    if _ROLL_SIGN is None:
        x = jnp.arange(8 * 128, dtype=jnp.int32).reshape(8, 128)
        y = pl.pallas_call(
            _roll_probe_kernel,
            out_shape=jax.ShapeDtypeStruct((8, 128), jnp.int32),
        )(x)
        _ROLL_SIGN = 1 if int(y[0, 1]) == int(x[0, 0]) else -1
    return _ROLL_SIGN


def _np_roll(v, shift, axis, sign):
    """np.roll(v, shift, axis) built on the XLU rotate (pltpu.roll); identity folded out."""
    n = v.shape[axis]
    k = (sign * shift) % n
    if k == 0:
        return v
    return pltpu.roll(v, k, axis=axis)


def _vmem_limit_bytes():
    # ~75% of physical VMEM: ~96 MiB on v5e/v6e (128 MiB), ~48 MiB on v7x (64 MiB).
    try:
        cap = int(pltpu.get_tpu_info().vmem_capacity_bytes)
    except Exception:
        cap = 64 * 1024 * 1024  # conservative fallback (v7x-sized)
    return min(max(cap * 3 // 4, 32 * 1024 * 1024), 100 * 1024 * 1024)


def _pick_group(H, W):
    """Number of consecutive image rows packed side-by-side on the lane axis."""
    if W >= 128:
        return 1
    G = max(1, min(H, 128 // W))
    while H % G:
        G -= 1
    return G


# ----------------------------------------------------------------------------------------
# Kernel
# ----------------------------------------------------------------------------------------
def _make_kernel(C, Hp, L, W, roll_sign, unroll):
    """Per-batch kernel on a (C, Hp, L) logits block in the row-packed layout.

    Original pixel (r, j) lives at packed (r // G, (r % G) * W + j), with G = L // W.
    """
    G = L // W
    roll = functools.partial(_np_roll, sign=roll_sign)

    def kernel(x_ref, y_ref, out_ref):
        labels = y_ref[...]                                         # (Hp, L) int32
        row = lax.broadcasted_iota(jnp.int32, (Hp, L), 0)           # packed row index
        lane = lax.broadcasted_iota(jnp.int32, (Hp, L), 1)
        col = lane % W                                              # original column j

        # Adjacency masks in the packed layout (hoisted out of the class loops).
        m_left = col > 0                        # W-adjacent pair (j-1, j) exists
        m_up_in = lane >= W                     # H-adjacent pair inside a packed row
        m_up_x = (lane < W) & (row > 0)         # H-adjacent pair across packed rows
        has_up = m_up_in | (row > 0)
        has_down = (lane < (G - 1) * W) | (row < Hp - 1)
        has_left = m_left
        has_right = col < W - 1

        # ---- pass 1 over classes: running max, first-occurrence argmax, logit@label ----
        def pass1(c, carry):
            m, pred, lbl = carry
            v = x_ref[c].astype(jnp.float32)                        # (Hp, L)
            gt = v > m                                              # strict > keeps first argmax
            return (jnp.where(gt, v, m),
                    jnp.where(gt, c, pred),
                    jnp.where(labels == c, v, lbl))

        m, pred, lbl = lax.fori_loop(
            0, C, pass1,
            (jnp.full((Hp, L), -jnp.inf, jnp.float32),
             jnp.zeros((Hp, L), jnp.int32),
             jnp.zeros((Hp, L), jnp.float32)),
            unroll=unroll)

        # ---- pass 2: softmax denominator (streamed, no (C, Hp, L) temporaries) ----
        def pass2(c, s):
            return s + jnp.exp(x_ref[c].astype(jnp.float32) - m)

        s = lax.fori_loop(0, C, pass2, jnp.zeros((Hp, L), jnp.float32), unroll=unroll)
        ce_sum = jnp.sum(m + jnp.log(s) - lbl)                      # sum of (lse - x[label])
        inv_s = pl.reciprocal(s, approx=True)                       # EUP; feeds edge term only

        # ---- pass 3: per-class probs -> |adjacent diffs|, one (Hp, L) accumulator ----
        def pass3(c, acc):
            p = jnp.exp(x_ref[c].astype(jnp.float32) - m) * inv_s   # (Hp, L)
            acc = acc + jnp.where(m_left, jnp.abs(p - roll(p, 1, 1)), 0.0)
            a = roll(p, W, 1)                                       # up-neighbor, same packed row
            acc = acc + jnp.where(m_up_in, jnp.abs(p - a), 0.0)
            acc = acc + jnp.where(m_up_x, jnp.abs(p - roll(a, 1, 0)), 0.0)
            return acc

        edge_acc = lax.fori_loop(0, C, pass3, jnp.zeros((Hp, L), jnp.float32),
                                 unroll=unroll)
        edge_sum = jnp.sum(edge_acc)

        # ---- local consistency on argmax classes (value-based 4-neighbor check) ----
        left = roll(pred, 1, 1)
        right = roll(pred, -1, 1)
        up_in = roll(pred, W, 1)
        up = jnp.where(m_up_in, up_in, roll(up_in, 1, 0))
        dn_in = roll(pred, -W, 1)
        down = jnp.where(lane < (G - 1) * W, dn_in, roll(dn_in, -1, 0))
        nref = jnp.where(has_up, up, down)                          # first existing neighbor
        all_eq = (jnp.where(has_up, up == nref, True)
                  & jnp.where(has_down, down == nref, True)
                  & jnp.where(has_left, left == nref, True)
                  & jnp.where(has_right, right == nref, True))
        cons_sum = jnp.sum(jnp.logical_and(all_eq, pred != nref).astype(jnp.float32))

        # ---- lane-dense per-batch partials: lanes 0/1/2 = ce / edge / consistency ----
        lane_o = lax.broadcasted_iota(jnp.int32, (1, 128), 1)
        out_ref[...] = jnp.where(
            lane_o == 0, ce_sum,
            jnp.where(lane_o == 1, edge_sum,
                      jnp.where(lane_o == 2, cons_sum, 0.0))).astype(jnp.float32)

    return kernel


# ----------------------------------------------------------------------------------------
# Wrapper
# ----------------------------------------------------------------------------------------
@functools.partial(jax.jit, static_argnames=(
    "weight_ce", "weight_edge", "weight_consistency", "roll_sign", "logits_dtype"))
def _combined_loss_impl(outputs, labels, *, weight_ce, weight_edge, weight_consistency,
                        roll_sign, logits_dtype):
    N, C, H, W = outputs.shape
    if H < 2 or W < 2:
        raise ValueError("consistency term assumes at least 2x2 spatial extent")
    if logits_dtype is not None:
        outputs = outputs.astype(logits_dtype)   # e.g. bf16 halves HBM traffic on v5e/v6e

    G = _pick_group(H, W)
    Hp, L = H // G, G * W
    x = outputs.reshape(N, C, Hp, L)             # free row-major re-grouping
    y = labels.astype(jnp.int32).reshape(N, Hp, L)

    kernel = _make_kernel(C=C, Hp=Hp, L=L, W=W, roll_sign=roll_sign, unroll=bool(C <= 8))

    # TODO(synk): for segmentation-scale inputs on v7x (e.g. C=21, 512x512), add a second
    # grid axis over Hp with a 1-row halo + seam-corrected edge/consistency so the block
    # plus double buffering stays under 64 MiB VMEM and both TensorCores are used at N=1.
    partials = pl.pallas_call(
        kernel,
        out_shape=jax.ShapeDtypeStruct((N, 1, 128), jnp.float32),
        grid=(N,),
        in_specs=[
            pl.BlockSpec((None, C, Hp, L), lambda b: (b, 0, 0, 0)),
            pl.BlockSpec((None, Hp, L), lambda b: (b, 0, 0)),
        ],
        out_specs=pl.BlockSpec((None, 1, 128), lambda b: (b, 0, 0)),
        compiler_params=pltpu.CompilerParams(
            dimension_semantics=("parallel",),            # per-batch partials -> no races
            vmem_limit_bytes=_vmem_limit_bytes(),
        ),
    )(x, y)

    sums = jnp.sum(partials[:, 0, :3], axis=0)            # (3,) f32 reduce of partials
    ce_loss = sums[0] / (N * H * W)                       # CrossEntropyLoss mean over pixels
    edge_loss = sums[1] / (H * W)                         # torch code divides by H*W only
    consistency_loss = sums[2] / (N * H * W)
    return (weight_ce * ce_loss
            + weight_edge * edge_loss
            + weight_consistency * consistency_loss)


def combined_loss(outputs, labels, weight_ce=1.1, weight_edge=0.001,
                  weight_consistency=0.1, logits_dtype=None):
    return _combined_loss_impl(
        outputs, labels,
        weight_ce=float(weight_ce), weight_edge=float(weight_edge),
        weight_consistency=float(weight_consistency),
        roll_sign=_pltpu_roll_sign(), logits_dtype=logits_dtype)


# ----------------------- pure-JAX / numpy reference for checking -----------------------
def _reference(outputs, labels, weight_ce=1.1, weight_edge=0.001, weight_consistency=0.1):
    outputs = np.asarray(outputs, dtype=np.float32)
    labels = np.asarray(labels)
    N, C, H, W = outputs.shape

    logp = np.asarray(jax.nn.log_softmax(jnp.asarray(outputs), axis=1))
    ce = -np.mean(np.take_along_axis(logp, labels[:, None], axis=1))

    probs = np.asarray(jax.nn.softmax(jnp.asarray(outputs), axis=1))
    edge = (np.sum(np.abs(probs[:, :, 1:, :] - probs[:, :, :-1, :]))
            + np.sum(np.abs(probs[:, :, :, 1:] - probs[:, :, :, :-1]))) / (H * W)

    pred = np.argmax(outputs, axis=1)
    count = 0
    for b in range(N):
        for i in range(H):
            for j in range(W):
                nbrs = []
                if i > 0:
                    nbrs.append(pred[b, i - 1, j])
                if i < H - 1:
                    nbrs.append(pred[b, i + 1, j])
                if j > 0:
                    nbrs.append(pred[b, i, j - 1])
                if j < W - 1:
                    nbrs.append(pred[b, i, j + 1])
                if len(set(int(v) for v in nbrs)) == 1 and pred[b, i, j] != nbrs[0]:
                    count += 1
    cons = count / (N * H * W)
    return weight_ce * ce + weight_edge * edge + weight_consistency * cons


if __name__ == "__main__":
    key = jax.random.PRNGKey(0)
    k1, k2 = jax.random.split(key)
    N, C, H, W = 2, 4, 16, 16
    outputs = jax.random.normal(k1, (N, C, H, W), dtype=jnp.float32)
    labels = jax.random.randint(k2, (N, H, W), 0, C, dtype=jnp.int32)

    total = jax.block_until_ready(combined_loss(outputs, labels))
    ref = _reference(outputs, labels)
    assert np.allclose(np.asarray(total), ref, rtol=1e-4, atol=1e-5), (float(total), float(ref))

    # bf16-from-HBM path (halves the logits DMA stream on bandwidth-bound v5e/v6e);
    # loose check only, since bf16 rounding happens before the softmax/argmax.
    total_bf16 = jax.block_until_ready(
        combined_loss(outputs, labels, logits_dtype=jnp.bfloat16))
    assert np.isfinite(float(total_bf16))
    assert abs(float(total_bf16) - ref) < 0.05 * abs(ref) + 0.01, (float(total_bf16), float(ref))

    print("KERNEL_OK")
</pallas_src>

<mosaic_0001>
module attributes {stable_mosaic.version = 11 : i64} {
  func.func @_roll_probe_kernel(%arg0: memref<8x128xi32, #tpu.memory_space<vmem>>, %arg1: memref<8x128xi32, #tpu.memory_space<vmem>>) attributes {dimension_semantics = [], scalar_prefetch = 0 : i64, scratch_operands = 0 : i64, tpu.core_type = #tpu.core_type<tc>} {
    %c0 = arith.constant 0 : index
    %c0_0 = arith.constant 0 : index
    %0 = vector.load %arg0[%c0, %c0_0] : memref<8x128xi32, #tpu.memory_space<vmem>>, vector<8x128xi32>
    %c1_i32 = arith.constant 1 : i32
    %1 = tpu.dynamic_rotate %0 by %c1_i32 dim 1 : vector<8x128xi32>, i32 -> vector<8x128xi32>
    %c0_1 = arith.constant 0 : index
    %c0_2 = arith.constant 0 : index
    %2 = vector.load %arg1[%c0_1, %c0_2] : memref<8x128xi32, #tpu.memory_space<vmem>>, vector<8x128xi32>
    tpu.vector_store %arg1[%c0_1, %c0_2], %1 {strides = array<i32>} : memref<8x128xi32, #tpu.memory_space<vmem>>, vector<8x128xi32>,
    return
  }
}

</mosaic_0001>

<llo_original>
// kernel: tpu_custom_call.1
$region0: #{tpu_custom_call.1}
  #allocation0 [shape = 'u32[]', space=smem, size = 0x4, offset = 0x4, fixed_abs, tag = 'smem constant byte address 0x4 - core index']
  #allocation1 [shape = 'u32[72,128]{1,0:T(1,128)}', space=vmem, size = 0x9000, scoped, tag = 'internal scratch']
  %s0 = inlined_call_operand.hbm [shape: s32[8,128], index: 0, kind: input, shape index: {}]
  %s1 = inlined_call_operand.hbm [shape: s32[8,128], index: 1, kind: output, shape index: {}]
  %s2 = sld [smem:[#allocation0]]
  $region18: #{tpu_custom_call.1} parent=0
    _
  %s4 = ssub.s32 1, %s2
  %s5 = scalar_select 0, %s4, %s2
  $region1: #{tpu_custom_call.1} parent=0
    #allocation2 [shape = 'u8[4096]{0}', space=vmem, size = 0x1000, scoped, tag = 'input window, operand 0, single buffered']
    #allocation3 [shape = 's32[1]{0}', space=sflag, size = 0x4, scoped, tag = 'scoped memory for tpu_custom_call.1']
    #allocation4 [shape = 's32[1]{0}', space=sflag, size = 0x4, scoped, tag = 'scoped memory for tpu_custom_call.1']
    #allocation5 [shape = 'u8[4096]{0}', space=vmem, size = 0x1000, scoped, tag = 'output window, operand 0, single buffered']
    %6 = vsyncpa [#allocation3], 0
    %7 = vsyncpa [#allocation4], 0
    // Predicated region
    $region2: #{tpu_custom_call.1} parent=1 // pred_check
      _
    $region3: #{tpu_custom_call.1} parent=1 // pred_check_branch
      %9 = sbr.rel (0) target = $region5
    $region4: #{tpu_custom_call.1} parent=1 // pred_region
      %11 = vsyncadd [#allocation3], 0
      %s13 = sshll.u32 %s0, 4
      %s14 = int_to_ptr.hbm [resolvable:$true] %s13
      %s15 = sshll.u32 [#allocation2], 4
      %s16 = int_to_ptr.vmem [resolvable:$true] %s15
      %18 = dma.hbm_to_vmem [thread:$0]  %s14, 128, %s16, [#allocation3]
    $region5: #{tpu_custom_call.1} parent=1 // pred_fallthru
      _
    // Predicated region
    $region6: #{tpu_custom_call.1} parent=1 // pred_check
      _
    $region7: #{tpu_custom_call.1} parent=1 // pred_check_branch
      %20 = sbr.rel (0) target = $region9
    $region8: #{tpu_custom_call.1} parent=1 // pred_region
      %22 = dma.done [#allocation3], 128
    $region9: #{tpu_custom_call.1} parent=1 // pred_fallthru
      _
    %v23 = vld [vmem:[#allocation2] sm:$0xff]
    %24 = vrot.lane.b32.xlu0 %v23, 1
    %v25 = vpop.permute.xlu0 %24
    %26 = vst [vmem:[#allocation5] sm:$0xff] %v25
    // Predicated region
    $region10: #{tpu_custom_call.1} parent=1 // pred_check
      _
    $region11: #{tpu_custom_call.1} parent=1 // pred_check_branch
      %28 = sbr.rel (0) target = $region13
    $region12: #{tpu_custom_call.1} parent=1 // pred_region
      %30 = vsyncadd [#allocation4], 0
      %s32 = sshll.u32 [#allocation5], 4
      %s33 = int_to_ptr.vmem [resolvable:$true] %s32
      %s34 = sshll.u32 %s1, 4
      %s35 = int_to_ptr.hbm [resolvable:$true] %s34
      %37 = dma.vmem_to_hbm [thread:$0]  %s33, 128, %s35, [#allocation4]
    $region13: #{tpu_custom_call.1} parent=1 // pred_fallthru
      _
    // Predicated region
    $region14: #{tpu_custom_call.1} parent=1 // pred_check
      _
    $region15: #{tpu_custom_call.1} parent=1 // pred_check_branch
      %39 = sbr.rel (0) target = $region17
    $region16: #{tpu_custom_call.1} parent=1 // pred_region
      %41 = dma.done [#allocation4], 128
    $region17: #{tpu_custom_call.1} parent=1 // pred_fallthru
      _
    %42 = vsyncpa [#allocation3], 1
    %43 = vsyncpa [#allocation4], 1

</llo_original>
